<compile_context>
chip_gen: v5e
topology: v5e:2x2
jax: 0.10.0
libtpu: 0.0.40
codegen_flags: <defaults>
</compile_context>

<pallas_src>
import jax
import jax.numpy as jnp
from jax.experimental import pallas as pl
from jax.experimental.pallas import tpu as pltpu


_COL_CANDIDATES = (1024, 512, 256, 128)   # lane-dense last dims (multiples of 128)
_TARGET_BLOCK_BYTES = 8 << 20             # ~8 MiB per block per stream
_VMEM_LIMIT_BYTES = 48 << 20              # in+out double-buffered 8 MiB blocks = 32 MiB
_MIN_KERNEL_BYTES = 1 << 18               # below this, jnp.cos (XLA fuses it for free)


def _cos_kernel(x_ref, o_ref):
    x = x_ref[...]
    if jnp.issubdtype(x.dtype, jnp.floating) and jnp.dtype(x.dtype).itemsize < 4:
        # bf16/fp16: range reduction at storage precision loses accuracy for
        # moderate |x|; the kernel is memory-bound so the f32 upcast is free.
        x = x.astype(jnp.float32)
    o_ref[...] = jnp.cos(x).astype(o_ref.dtype)


def _sublane_multiple(dtype) -> int:
    # Packed-sublane tiling requirement for the second-to-last block dim.
    itemsize = jnp.dtype(dtype).itemsize
    return {4: 8, 2: 16, 1: 32}.get(itemsize, 8)


def _vmem_budget():
    """(target_block_bytes, vmem_limit_bytes), clamped by physical VMEM if known."""
    target, limit = _TARGET_BLOCK_BYTES, _VMEM_LIMIT_BYTES
    try:
        cap = int(pltpu.get_tpu_info().vmem_capacity_bytes)
        # Total double-buffered footprint is ~4x the block size; keep headroom.
        target = min(target, max(1 << 20, cap // 8))
        limit = min(limit, (cap * 3) // 4)
    except Exception:
        pass
    return target, limit


def _cosign_pallas(x: jax.Array, cols: int | None = None, *,
                   donate: bool = False,
                   target_block_bytes: int | None = None) -> jax.Array:
    """Lane-dense (rows, cols) slab, 1-D streaming grid over rows. No padding."""
    n = x.size
    dtype = x.dtype
    itemsize = jnp.dtype(dtype).itemsize

    if cols is None:
        cols = next((c for c in _COL_CANDIDATES if n % c == 0), None)
    assert cols is not None and n % cols == 0, "element count must be a multiple of 128"

    rows = n // cols
    sub = _sublane_multiple(dtype)

    tgt, vmem_limit = _vmem_budget()
    if target_block_bytes is not None:
        tgt = target_block_bytes

    # Byte-based block sizing (same bytes/step for every dtype), rounded to the
    # sublane packing multiple.  Partial boundary blocks are masked by Pallas,
    # so block_rows need not divide rows.
    block_rows = max(sub, (tgt // (cols * itemsize)) // sub * sub)
    if block_rows >= rows:
        block_rows = rows  # single full-extent block; no (8,)-alignment needed

    grid = (pl.cdiv(rows, block_rows),)
    x2d = x.reshape(rows, cols)  # contiguous reshape: bitcast, no data movement

    extra = {}
    if donate:
        extra["input_output_aliases"] = {0: 0}

    out2d = pl.pallas_call(
        _cos_kernel,
        out_shape=jax.ShapeDtypeStruct((rows, cols), dtype),
        grid=grid,
        in_specs=[pl.BlockSpec((block_rows, cols), lambda i: (i, 0))],
        out_specs=pl.BlockSpec((block_rows, cols), lambda i: (i, 0)),
        compiler_params=pltpu.CompilerParams(
            # One streaming axis; "parallel" lets v7x shard it across its 2 TCs.
            # TODO(synk): if an xprof trace shows one v7x TC idle, switch this
            # axis to pltpu.CORE_PARALLEL.
            dimension_semantics=("parallel",),
            vmem_limit_bytes=vmem_limit,
        ),
        cost_estimate=pl.CostEstimate(
            flops=0,
            transcendentals=n,
            bytes_accessed=2 * n * itemsize,
        ),
        **extra,
    )(x2d)

    return out2d.reshape(x.shape)


def cosign(x: jax.Array, *, min_kernel_bytes: int = _MIN_KERNEL_BYTES,
           donate: bool = False) -> jax.Array:
    """Pallas equivalent of Cosign.forward: elementwise cos, same shape/dtype."""
    n = x.size
    if n == 0:
        return jnp.cos(x)
    if n * jnp.dtype(x.dtype).itemsize < min_kernel_bytes:
        # Tiny input: launch/DMA overhead dwarfs the work; let XLA fuse it.
        return jnp.cos(x)
    if n % 128 != 0:
        # Ragged size: pad+slice or bulk+tail+concat would add a full extra
        # HBM pass on a memory-bound op; XLA's fused cos is one pass already.
        return jnp.cos(x)
    return _cosign_pallas(x, donate=donate)


if __name__ == "__main__":
    key = jax.random.PRNGKey(0)
    k1, k2, k3 = jax.random.split(key, 3)

    # Small NCHW input consistent with the module's generic interface.
    # 2048 elements -> (rows=2, cols=1024), single full-extent block.
    x_small = jax.random.normal(k1, (2, 4, 16, 16), dtype=jnp.float32)
    y_small = cosign(x_small, min_kernel_bytes=0)  # force the Pallas path
    jax.block_until_ready(y_small)
    assert y_small.shape == x_small.shape and y_small.dtype == x_small.dtype
    assert jnp.allclose(y_small, jnp.cos(x_small), atol=1e-6, rtol=1e-6)

    # Non-dividing grid: rows=40, forced 16-row blocks -> 3 steps with a
    # partial (masked) boundary block.  No padding anywhere.
    x_ragged = jax.random.normal(k2, (40, 1024), dtype=jnp.float32)
    y_ragged = _cosign_pallas(x_ragged, target_block_bytes=16 * 1024 * 4)
    jax.block_until_ready(y_ragged)
    assert jnp.allclose(y_ragged, jnp.cos(x_ragged), atol=1e-6, rtol=1e-6)

    # bf16 path: in-kernel f32 compute, bf16 store.
    x_bf16 = jax.random.normal(k3, (8, 16, 32), dtype=jnp.bfloat16)
    y_bf16 = cosign(x_bf16, min_kernel_bytes=0)
    jax.block_until_ready(y_bf16)
    assert y_bf16.dtype == x_bf16.dtype
    assert jnp.allclose(
        y_bf16.astype(jnp.float32),
        jnp.cos(x_bf16.astype(jnp.float32)),
        atol=2e-2, rtol=2e-2,
    )

    print("KERNEL_OK")
</pallas_src>

<mosaic_0001>
module attributes {stable_mosaic.version = 11 : i64} {
  func.func @_cos_kernel(%arg0: i32, %arg1: memref<2x1024xf32, #tpu.memory_space<vmem>>, %arg2: memref<2x1024xf32, #tpu.memory_space<vmem>>) attributes {dimension_semantics = [#tpu.dimension_semantics<parallel>], iteration_bounds = array<i64: 1>, scalar_prefetch = 0 : i64, scratch_operands = 0 : i64, tpu.core_type = #tpu.core_type<tc>, window_params = [{transform_indices = @transform_0, window_bounds = array<i64: 2, 1024>}, {transform_indices = @transform_1, window_bounds = array<i64: 2, 1024>}]} {
    %c0 = arith.constant 0 : index
    %c0_0 = arith.constant 0 : index
    %0 = vector.load %arg1[%c0, %c0_0] : memref<2x1024xf32, #tpu.memory_space<vmem>>, vector<2x1024xf32>
    %1 = math.cos %0 : vector<2x1024xf32>
    %c0_1 = arith.constant 0 : index
    %c0_2 = arith.constant 0 : index
    %2 = vector.load %arg2[%c0_1, %c0_2] : memref<2x1024xf32, #tpu.memory_space<vmem>>, vector<2x1024xf32>
    tpu.vector_store %arg2[%c0_1, %c0_2], %1 {strides = array<i32>} : memref<2x1024xf32, #tpu.memory_space<vmem>>, vector<2x1024xf32>,
    return
  }
  func.func @transform_0(%arg0: i32) -> (i32, i32) {
    %c0_i32 = arith.constant 0 : i32
    %c0_i32_0 = arith.constant 0 : i32
    return %arg0, %c0_i32 : i32, i32
  }
  func.func @transform_1(%arg0: i32) -> (i32, i32) {
    %c0_i32 = arith.constant 0 : i32
    %c0_i32_0 = arith.constant 0 : i32
    return %arg0, %c0_i32 : i32, i32
  }
}

</mosaic_0001>

<llo_original>
// kernel: tpu_custom_call.1
$region0: #{tpu_custom_call.1}
  #allocation0 [shape = 'u32[]', space=smem, size = 0x4, offset = 0x4, fixed_abs, tag = 'smem constant byte address 0x4 - core index']
  #allocation1 [shape = 'u32[72,128]{1,0:T(1,128)}', space=vmem, size = 0x9000, scoped, tag = 'internal scratch']
  %s0 = inlined_call_operand.hbm [shape: f32[2,1024], index: 0, kind: input, shape index: {}]
  %s1 = inlined_call_operand.hbm [shape: f32[2,1024], index: 1, kind: output, shape index: {}]
  %s2 = sld [smem:[#allocation0]]
  $region18: #{tpu_custom_call.1} parent=0
    _
  %s4 = ssub.s32 1, %s2
  %s5 = scalar_select 0, %s4, %s2
  $region1: #{tpu_custom_call.1} parent=0
    #allocation2 [shape = 'u8[8192]{0}', space=vmem, size = 0x2000, scoped, tag = 'input window, operand 0, single buffered']
    #allocation3 [shape = 's32[1]{0}', space=sflag, size = 0x4, scoped, tag = 'scoped memory for tpu_custom_call.1']
    #allocation4 [shape = 's32[1]{0}', space=sflag, size = 0x4, scoped, tag = 'scoped memory for tpu_custom_call.1']
    #allocation5 [shape = 'u8[8192]{0}', space=vmem, size = 0x2000, scoped, tag = 'output window, operand 0, single buffered']
    %6 = vsyncpa [#allocation3], 0
    %7 = vsyncpa [#allocation4], 0
    // Predicated region
    $region2: #{tpu_custom_call.1} parent=1 // pred_check
      _
    $region3: #{tpu_custom_call.1} parent=1 // pred_check_branch
      %9 = sbr.rel (0) target = $region5
    $region4: #{tpu_custom_call.1} parent=1 // pred_region
      %11 = vsyncadd [#allocation3], 0
      %s13 = sshll.u32 %s0, 4
      %s14 = int_to_ptr.hbm [resolvable:$true] %s13
      %s15 = sshll.u32 [#allocation2], 4
      %s16 = int_to_ptr.vmem [resolvable:$true] %s15
      %18 = dma.hbm_to_vmem [thread:$0]  %s14, 256, %s16, [#allocation3]
    $region5: #{tpu_custom_call.1} parent=1 // pred_fallthru
      _
    // Predicated region
    $region6: #{tpu_custom_call.1} parent=1 // pred_check
      _
    $region7: #{tpu_custom_call.1} parent=1 // pred_check_branch
      %20 = sbr.rel (0) target = $region9
    $region8: #{tpu_custom_call.1} parent=1 // pred_region
      %22 = dma.done [#allocation3], 256
    $region9: #{tpu_custom_call.1} parent=1 // pred_fallthru
      _
    %v23 = vld [vmem:[#allocation2] sm:$0xff]
    %v24 = vld [vmem:[#allocation2 + $0x8] sm:$0xff]
    %v25 = vand.u32 2147483647, %v23
    %vm26 = vcmp.le.f32.partialorder %v25, 0.7853982
    %vm27 = vcmp.lt.s32.totalorder %v23, 0
    %v28 = vand.u32 %v23, 2139095040
    %v29 = vshrl.u32 %v28, 23
    %v30 = vsub.s32 %v29, 127
    %v31 = vand.u32 2147483647, %v23
    %v32 = vand.u32 %v31, 8388607
    %v33 = vor.u32 %v32, 8388608
    %v34 = vsub.s32 0, %v33
    %v35 = vadd.s32 %v30, 1
    %vm36 = vcmp.gt.s32.totalorder %v35, 0
    %v37 = vsel %vm36, %v35, 0
    %v38 = vshrl.u32 %v37, 5
    %v39 = vand.u32 %v37, 31
    %v40 = vsub.s32 32, %v39
    %v41 = vshrl.u32 683565275, %v40
    %v42 = vshll.u32 683565275, %v39
    %v43 = vshrl.u32 2475754826, %v40
    %v44 = vor.u32 %v42, %v43
    %v45 = vshll.u32 2475754826, %v39
    %v46 = vshrl.u32 2131351028, %v40
    %v47 = vor.u32 %v45, %v46
    %v48 = vshll.u32 2131351028, %v39
    %v49 = vshrl.u32 2102212464, %v40
    %v50 = vor.u32 %v48, %v49
    %v51 = vshll.u32 2102212464, %v39
    %v52 = vshrl.u32 920167782, %v40
    %v53 = vor.u32 %v51, %v52
    %v54 = vshll.u32 920167782, %v39
    %v55 = vshrl.u32 1326507024, %v40
    %v56 = vor.u32 %v54, %v55
    %vm57 = vcmp.lt.s32.totalorder %v38, 1
    %vm58 = vcmp.lt.s32.totalorder %v38, 2
    %vm59 = vcmp.lt.s32.totalorder %v38, 3
    %vm60 = vcmp.lt.s32.totalorder %v38, 4
    %v61 = vsel %vm57, %v41, %v44
    %v62 = vsel %vm60, %v50, 2102212464
    %v63 = vsel %vm59, %v47, %v62
    %v64 = vsel %vm58, %v61, %v63
    %v65 = vsel %vm57, %v44, %v47
    %v66 = vsel %vm60, %v53, 920167782
    %v67 = vsel %vm59, %v50, %v66
    %v68 = vsel %vm58, %v65, %v67
    %v69 = vsel %vm57, %v47, %v50
    %v70 = vsel %vm60, %v56, 1326507024
    %v71 = vsel %vm59, %v53, %v70
    %v72 = vsel %vm58, %v69, %v71
    %v73 = vshll.u32 %v33, 8
    %v74 = vand.u32 %v73, 65535
    %v75 = vshrl.u32 %v73, 16
    %v76 = vand.u32 %v72, 65535
    %v77 = vshrl.u32 %v72, 16
    %v78 = vmul.u32 %v74, %v76
    %v79 = vmul.u32 %v74, %v77
    %v80 = vmul.u32 %v75, %v76
    %v81 = vmul.u32 %v75, %v77
    %v82 = vshll.u32 %v79, 16
    %v83 = vshrl.u32 %v79, 16
    %v84 = vshll.u32 %v80, 16
    %v85 = vshrl.u32 %v80, 16
    %vm86 = vc.u32 %v78, %v82
    %v87 = vsel %vm86, 1, 0
    %v88 = vadd.s32 %v78, %v82
    %v89 = vadd.s32 %v81, %v87
    %vm90 = vc.u32 %v88, %v84
    %v91 = vsel %vm90, 1, 0
    %v92 = vadd.s32 %v88, %v84
    %v93 = vadd.s32 %v89, %v91
    %v94 = vadd.s32 %v93, %v83
    %v95 = vadd.s32 %v94, %v85
    %v96 = vand.u32 %v73, 65535
    %v97 = vshrl.u32 %v73, 16
    %v98 = vand.u32 %v68, 65535
    %v99 = vshrl.u32 %v68, 16
    %v100 = vmul.u32 %v96, %v98
    %v101 = vmul.u32 %v96, %v99
    %v102 = vmul.u32 %v97, %v98
    %v103 = vmul.u32 %v97, %v99
    %v104 = vshll.u32 %v101, 16
    %v105 = vshrl.u32 %v101, 16
    %v106 = vshll.u32 %v102, 16
    %v107 = vshrl.u32 %v102, 16
    %vm108 = vc.u32 %v100, %v104
    %v109 = vsel %vm108, 1, 0
    %v110 = vadd.s32 %v100, %v104
    %v111 = vadd.s32 %v103, %v109
    %vm112 = vc.u32 %v110, %v106
    %v113 = vsel %vm112, 1, 0
    %v114 = vadd.s32 %v110, %v106
    %v115 = vadd.s32 %v111, %v113
    %v116 = vadd.s32 %v115, %v105
    %v117 = vadd.s32 %v116, %v107
    %v118 = vmul.u32 %v73, %v64
    %v119 = vadd.s32 %v95, %v114
    %vm120 = vc.u32 %v95, %v114
    %v121 = vadd.s32 %v117, 1
    %v122 = vsel %vm120, %v121, %v117
    %v123 = vadd.s32 %v118, %v122
    %v124 = vadd.s32 %v123, 536870912
    %v125 = vshrl.u32 %v124, 30
    %v126 = vshll.u32 %v125, 30
    %v127 = vsub.s32 %v123, %v126
    %vm128 = vcmp.lt.s32.totalorder %v127, 0
    %v129 = vsub.s32 0, %v127
    %v130 = vsel %vm128, %v129, %v127
    %v131 = vclz %v130
    %v132 = vsub.s32 %v131, 2
    %vm133 = vcmp.gt.s32.totalorder 0, %v132
    %v134 = vsel %vm133, 0, %v132
    %v135 = vsub.s32 32, %v134
    %v136 = vshll.u32 %v127, %v134
    %v137 = vshrl.u32 %v119, %v135
    %v138 = vor.u32 %v136, %v137
    %v139 = vsub.s32 4294967266, %v134
    %v140 = vadd.s32 %v139, 127
    %v141 = vshll.u32 %v140, 23
    %v142 = vor.u32 4788187, %v141
    %v143 = vand.u32 2147483647, %v142
    %v145 = vcvt.s32.f32 %v138
    %v146 = vmul.f32 %v145, %v143
    %v147 = vxor.u32 %v146, 2147483648
    %v148 = vsel %vm27, %v147, %v146
    %v149 = vsub.s32 4, %v125
    %v150 = vsel %vm27, %v149, %v125
    %v151 = vsel %vm26, %v23, %v148
    %v152 = vsel %vm26, 0, %v150
    %v153 = vmul.f32 %v151, %v151
    %v154 = vmul.f32 %v153, -0.001358992
    %v155 = vadd.f32 %v154, 0.041655596
    %v156 = vmul.f32 %v153, %v155
    %v157 = vadd.f32 %v156, -0.4999988
    %v158 = vmul.f32 %v153, %v157
    %v159 = vadd.f32 1.0, %v158
    %v160 = vmul.f32 %v151, %v151
    %v161 = vmul.f32 %v160, -0.00019511016
    %v162 = vadd.f32 %v161, 0.008332121
    %v163 = vmul.f32 %v160, %v162
    %v164 = vadd.f32 %v163, -0.16666654
    %v165 = vmul.f32 %v160, %v164
    %v166 = vadd.f32 %v165, 1.0
    %v167 = vmul.f32 %v166, %v151
    %vm168 = vweird.f32 %v23
    %v169 = vand.u32 %v152, 3
    %vm170 = vcmp.lt.s32.totalorder %v169, 2
    %vm171 = vcmp.eq.s32.totalorder %v169, 0
    %v172 = vxor.u32 %v167, 2147483648
    %v173 = vsel %vm171, %v159, %v172
    %vm174 = vcmp.eq.s32.totalorder %v169, 2
    %v175 = vxor.u32 %v159, 2147483648
    %v176 = vsel %vm174, %v175, %v167
    %v177 = vsel %vm170, %v173, %v176
    %v178 = vsel %vm168, nan, %v177
    %v179 = vand.u32 2147483647, %v24
    %vm180 = vcmp.le.f32.partialorder %v179, 0.7853982
    %vm181 = vcmp.lt.s32.totalorder %v24, 0
    %v182 = vand.u32 %v24, 2139095040
    %v183 = vshrl.u32 %v182, 23
    %v184 = vsub.s32 %v183, 127
    %v185 = vand.u32 2147483647, %v24
    %v186 = vand.u32 %v185, 8388607
    %v187 = vor.u32 %v186, 8388608
    %v188 = vsub.s32 0, %v187
    %v189 = vadd.s32 %v184, 1
    %vm190 = vcmp.gt.s32.totalorder %v189, 0
    %v191 = vsel %vm190, %v189, 0
    %v192 = vshrl.u32 %v191, 5
    %v193 = vand.u32 %v191, 31
    %v194 = vsub.s32 32, %v193
    %v195 = vshrl.u32 683565275, %v194
    %v196 = vshll.u32 683565275, %v193
    %v197 = vshrl.u32 2475754826, %v194
    %v198 = vor.u32 %v196, %v197
    %v199 = vshll.u32 2475754826, %v193
    %v200 = vshrl.u32 2131351028, %v194
    %v201 = vor.u32 %v199, %v200
    %v202 = vshll.u32 2131351028, %v193
    %v203 = vshrl.u32 2102212464, %v194
    %v204 = vor.u32 %v202, %v203
    %v205 = vshll.u32 2102212464, %v193
    %v206 = vshrl.u32 920167782, %v194
    %v207 = vor.u32 %v205, %v206
    %v208 = vshll.u32 920167782, %v193
    %v209 = vshrl.u32 1326507024, %v194
    %v210 = vor.u32 %v208, %v209
    %vm211 = vcmp.lt.s32.totalorder %v192, 1
    %vm212 = vcmp.lt.s32.totalorder %v192, 2
    %vm213 = vcmp.lt.s32.totalorder %v192, 3
    %vm214 = vcmp.lt.s32.totalorder %v192, 4
    %v215 = vsel %vm211, %v195, %v198
    %v216 = vsel %vm214, %v204, 2102212464
    %v217 = vsel %vm213, %v201, %v216
    %v218 = vsel %vm212, %v215, %v217
    %v219 = vsel %vm211, %v198, %v201
    %v220 = vsel %vm214, %v207, 920167782
    %v221 = vsel %vm213, %v204, %v220
    %v222 = vsel %vm212, %v219, %v221
    %v223 = vsel %vm211, %v201, %v204
    %v224 = vsel %vm214, %v210, 1326507024
    %v225 = vsel %vm213, %v207, %v224
    %v226 = vsel %vm212, %v223, %v225
    %v227 = vshll.u32 %v187, 8
    %v228 = vand.u32 %v227, 65535
    %v229 = vshrl.u32 %v227, 16
    %v230 = vand.u32 %v226, 65535
    %v231 = vshrl.u32 %v226, 16
    %v232 = vmul.u32 %v228, %v230
    %v233 = vmul.u32 %v228, %v231
    %v234 = vmul.u32 %v229, %v230
    %v235 = vmul.u32 %v229, %v231
    %v236 = vshll.u32 %v233, 16
    %v237 = vshrl.u32 %v233, 16
    %v238 = vshll.u32 %v234, 16
    %v239 = vshrl.u32 %v234, 16
    %vm240 = vc.u32 %v232, %v236
    %v241 = vsel %vm240, 1, 0
    %v242 = vadd.s32 %v232, %v236
    %v243 = vadd.s32 %v235, %v241
    %vm244 = vc.u32 %v242, %v238
    %v245 = vsel %vm244, 1, 0
    %v246 = vadd.s32 %v242, %v238
    %v247 = vadd.s32 %v243, %v245
    %v248 = vadd.s32 %v247, %v237
    %v249 = vadd.s32 %v248, %v239
    %v250 = vand.u32 %v227, 65535
    %v251 = vshrl.u32 %v227, 16
    %v252 = vand.u32 %v222, 65535
    %v253 = vshrl.u32 %v222, 16
    %v254 = vmul.u32 %v250, %v252
    %v255 = vmul.u32 %v250, %v253
    %v256 = vmul.u32 %v251, %v252
    %v257 = vmul.u32 %v251, %v253
    %v258 = vshll.u32 %v255, 16
    %v259 = vshrl.u32 %v255, 16
    %v260 = vshll.u32 %v256, 16
    %v261 = vshrl.u32 %v256, 16
    %vm262 = vc.u32 %v254, %v258
    %v263 = vsel %vm262, 1, 0
    %v264 = vadd.s32 %v254, %v258
    %v265 = vadd.s32 %v257, %v263
    %vm266 = vc.u32 %v264, %v260
    %v267 = vsel %vm266, 1, 0
    %v268 = vadd.s32 %v264, %v260
    %v269 = vadd.s32 %v265, %v267
    %v270 = vadd.s32 %v269, %v259
    %v271 = vadd.s32 %v270, %v261
    %v272 = vmul.u32 %v227, %v218
    %v273 = vadd.s32 %v249, %v268
    %vm274 = vc.u32 %v249, %v268
    %v275 = vadd.s32 %v271, 1
    %v276 = vsel %vm274, %v275, %v271
    %v277 = vadd.s32 %v272, %v276
    %v278 = vadd.s32 %v277, 536870912
    %v279 = vshrl.u32 %v278, 30
    %v280 = vshll.u32 %v279, 30
    %v281 = vsub.s32 %v277, %v280
    %vm282 = vcmp.lt.s32.totalorder %v281, 0
    %v283 = vsub.s32 0, %v281
    %v284 = vsel %vm282, %v283, %v281
    %v285 = vclz %v284
    %v286 = vsub.s32 %v285, 2
    %vm287 = vcmp.gt.s32.totalorder 0, %v286
    %v288 = vsel %vm287, 0, %v286
    %v289 = vsub.s32 32, %v288
    %v290 = vshll.u32 %v281, %v288
    %v291 = vshrl.u32 %v273, %v289
    %v292 = vor.u32 %v290, %v291
    %v293 = vsub.s32 4294967266, %v288
    %v294 = vadd.s32 %v293, 127
    %v295 = vshll.u32 %v294, 23
    %v296 = vor.u32 4788187, %v295
    %v297 = vand.u32 2147483647, %v296
    %v299 = vcvt.s32.f32 %v292
    %v300 = vmul.f32 %v299, %v297
    %v301 = vxor.u32 %v300, 2147483648
    %v302 = vsel %vm181, %v301, %v300
    %v303 = vsub.s32 4, %v279
    %v304 = vsel %vm181, %v303, %v279
    %v305 = vsel %vm180, %v24, %v302
    %v306 = vsel %vm180, 0, %v304
    %v307 = vmul.f32 %v305, %v305
    %v308 = vmul.f32 %v307, -0.001358992
    %v309 = vadd.f32 %v308, 0.041655596
    %v310 = vmul.f32 %v307, %v309
    %v311 = vadd.f32 %v310, -0.4999988
    %v312 = vmul.f32 %v307, %v311
    %v313 = vadd.f32 1.0, %v312
    %v314 = vmul.f32 %v305, %v305
    %v315 = vmul.f32 %v314, -0.00019511016
    %v316 = vadd.f32 %v315, 0.008332121
    %v317 = vmul.f32 %v314, %v316
    %v318 = vadd.f32 %v317, -0.16666654
    %v319 = vmul.f32 %v314, %v318
    %v320 = vadd.f32 %v319, 1.0
    %v321 = vmul.f32 %v320, %v305
    %vm322 = vweird.f32 %v24
    %v323 = vand.u32 %v306, 3
    %vm324 = vcmp.lt.s32.totalorder %v323, 2
    %vm325 = vcmp.eq.s32.totalorder %v323, 0
    %v326 = vxor.u32 %v321, 2147483648
    %v327 = vsel %vm325, %v313, %v326
    %vm328 = vcmp.eq.s32.totalorder %v323, 2
    %v329 = vxor.u32 %v313, 2147483648
    %v330 = vsel %vm328, %v329, %v321
    %v331 = vsel %vm324, %v327, %v330
    %v332 = vsel %vm322, nan, %v331
    %333 = vst [vmem:[#allocation5] sm:$0xff] %v178
    %334 = vst [vmem:[#allocation5 + $0x8] sm:$0xff] %v332
    // Predicated region
    $region10: #{tpu_custom_call.1} parent=1 // pred_check
      _
    $region11: #{tpu_custom_call.1} parent=1 // pred_check_branch
      %336 = sbr.rel (0) target = $region13
    $region12: #{tpu_custom_call.1} parent=1 // pred_region
      %338 = vsyncadd [#allocation4], 0
      %s340 = sshll.u32 [#allocation5], 4
      %s341 = int_to_ptr.vmem [resolvable:$true] %s340
      %s342 = sshll.u32 %s1, 4
      %s343 = int_to_ptr.hbm [resolvable:$true] %s342
      %345 = dma.vmem_to_hbm [thread:$0]  %s341, 256, %s343, [#allocation4]
    $region13: #{tpu_custom_call.1} parent=1 // pred_fallthru
      _
    // Predicated region
    $region14: #{tpu_custom_call.1} parent=1 // pred_check
      _
    $region15: #{tpu_custom_call.1} parent=1 // pred_check_branch
      %347 = sbr.rel (0) target = $region17
    $region16: #{tpu_custom_call.1} parent=1 // pred_region
      %349 = dma.done [#allocation4], 256
    $region17: #{tpu_custom_call.1} parent=1 // pred_fallthru
      _
    %350 = vsyncpa [#allocation3], 1
    %351 = vsyncpa [#allocation4], 1

</llo_original>
